<compile_context>
chip_gen: v6e
topology: v6e:2x2x1
jax: 0.10.0
libtpu: 0.0.40
codegen_flags: <defaults>
</compile_context>

<pallas_src>
import functools

import jax
import jax.numpy as jnp
from jax.experimental import pallas as pl
from jax.experimental.pallas import tpu as pltpu


def _round_up(n, m):
    return (n + m - 1) // m * m


# ---------------------------------------------------------------------------
# Kernel
# ---------------------------------------------------------------------------
def encoder_kernel(
    x_ref,      # (TB, in_pad)         compute dtype
    w1_ref,     # (in_pad, hid_pad)    compute dtype
    b1_ref,     # (1, hid_pad)         f32
    w2_ref,     # (hid_pad, hid_pad)   compute dtype
    b2_ref,     # (1, hid_pad)         f32
    wh_ref,     # (hid_pad, head_pad)  [Wloc | 0-pad | Wscale | 0-pad]
    bh_ref,     # (1, head_pad)        f32
    out_ref,    # (TB, head_pad)       [:, :loc_pad]=loc, [:, loc_pad:]=softplus(scale)
    *,
    loc_pad,
):
    """Fused Encoder forward for one batch tile (f32 accumulation everywhere)."""
    wt = w1_ref.dtype  # dtype fed to the MXU (f32 or bf16)

    # h = relu(x @ W1 + b1)
    h = jnp.dot(x_ref[...], w1_ref[...], preferred_element_type=jnp.float32)
    h = jnp.maximum(h + b1_ref[...], 0.0)

    # h = relu(h @ W2 + b2)
    h = jnp.dot(h.astype(wt), w2_ref[...], preferred_element_type=jnp.float32)
    h = jnp.maximum(h + b2_ref[...], 0.0)

    # Both heads in one matmul; slabs are 128-lane aligned so the split is free.
    z = jnp.dot(h.astype(wt), wh_ref[...], preferred_element_type=jnp.float32)
    z = z + bh_ref[...]

    loc = z[:, :loc_pad]
    s = z[:, loc_pad:]
    sp = jnp.maximum(s, 0.0) + jnp.log1p(jnp.exp(-jnp.abs(s)))  # stable softplus

    # Two 128-lane-aligned, unmasked stores (no iota/select mask needed).
    out_ref[:, :loc_pad] = loc.astype(out_ref.dtype)
    out_ref[:, loc_pad:] = sp.astype(out_ref.dtype)


# ---------------------------------------------------------------------------
# pallas_call wrapper (jitted; all shape knobs are static)
# ---------------------------------------------------------------------------
@functools.partial(
    jax.jit,
    static_argnames=("tb", "loc_pad", "output_dim", "batch", "out_dtype",
                     "single_buffer", "vmem_limit"),
)
def _encoder_pallas(xin, w1, b1, w2, b2, wh, bh, *, tb, loc_pad, output_dim,
                    batch, out_dtype, single_buffer, vmem_limit):
    Bp, in_pad = xin.shape
    hid_pad = w1.shape[1]
    head_pad = wh.shape[1]

    def const(shape):
        # Constant block index -> fetched once, VMEM-resident. Single-buffering
        # halves the resident footprint (matters on v7x's 64 MiB/TC).
        if single_buffer:
            return pl.BlockSpec(shape, lambda i: (0, 0),
                                pipeline_mode=pl.Buffered(1))
        return pl.BlockSpec(shape, lambda i: (0, 0))

    fused = pl.pallas_call(
        functools.partial(encoder_kernel, loc_pad=loc_pad),
        out_shape=jax.ShapeDtypeStruct((Bp, head_pad), out_dtype),
        grid=(Bp // tb,),
        in_specs=[
            pl.BlockSpec((tb, in_pad), lambda i: (i, 0)),   # x: streamed per tile
            const((in_pad, hid_pad)),                       # W1
            const((1, hid_pad)),                            # b1
            const((hid_pad, hid_pad)),                      # W2
            const((1, hid_pad)),                            # b2
            const((hid_pad, head_pad)),                     # fused head W
            const((1, head_pad)),                           # fused head b
        ],
        out_specs=pl.BlockSpec((tb, head_pad), lambda i: (i, 0)),
        compiler_params=pltpu.CompilerParams(
            dimension_semantics=("parallel",),
            vmem_limit_bytes=vmem_limit,
        ),
    )(xin, w1, b1, w2, b2, wh, bh)

    loc = fused[:batch, :output_dim]
    scale = fused[:batch, loc_pad:loc_pad + output_dim]
    return loc, scale


# ---------------------------------------------------------------------------
# One-time parameter packing (hoisted out of the per-call path)
# ---------------------------------------------------------------------------
def prepare_params(params, *, use_bf16=False):
    """Fuse loc/scale heads, zero-pad to lane-dense shapes, cast dtypes. Run once."""
    input_dim, hidden_dim = params["w1"].shape
    output_dim = params["wloc"].shape[1]

    compute_dtype = jnp.bfloat16 if use_bf16 else params["w1"].dtype
    # MXU granule: 256 helps the bf16 path on v6e/v7x; 128 is always legal.
    align = 256 if use_bf16 else 128
    in_pad = _round_up(input_dim, align)
    hid_pad = _round_up(hidden_dim, align)
    loc_pad = _round_up(max(output_dim, 1), 128)
    scale_pad = _round_up(max(output_dim, 1), 128)
    head_pad = loc_pad + scale_pad

    def pad2(w, r, c):
        return jnp.pad(w, ((0, r - w.shape[0]), (0, c - w.shape[1])))

    w1 = pad2(params["w1"], in_pad, hid_pad).astype(compute_dtype)
    w2 = pad2(params["w2"], hid_pad, hid_pad).astype(compute_dtype)
    wh = jnp.concatenate(
        [pad2(params["wloc"], hid_pad, loc_pad),
         pad2(params["wscale"], hid_pad, scale_pad)], axis=1
    ).astype(compute_dtype)

    b1 = jnp.pad(params["b1"], (0, hid_pad - hidden_dim)).reshape(1, hid_pad)
    b2 = jnp.pad(params["b2"], (0, hid_pad - hidden_dim)).reshape(1, hid_pad)
    bh = jnp.concatenate([
        jnp.pad(params["bloc"], (0, loc_pad - output_dim)),
        jnp.pad(params["bscale"], (0, scale_pad - output_dim)),
    ]).reshape(1, head_pad)

    arrays = dict(w1=w1, b1=b1.astype(jnp.float32),
                  w2=w2, b2=b2.astype(jnp.float32),
                  wh=wh, bh=bh.astype(jnp.float32))
    meta = dict(input_dim=input_dim, hidden_dim=hidden_dim, output_dim=output_dim,
                in_pad=in_pad, hid_pad=hid_pad, loc_pad=loc_pad, head_pad=head_pad,
                sub=16 if use_bf16 else 8, compute_dtype=compute_dtype)
    return dict(arrays=arrays, meta=meta)


def _vmem_limit_bytes(tb, meta, out_dtype, single_buffer):
    c = jnp.dtype(meta["compute_dtype"]).itemsize
    o = jnp.dtype(out_dtype).itemsize
    in_pad, hid_pad, head_pad = meta["in_pad"], meta["hid_pad"], meta["head_pad"]
    stream = 2 * tb * in_pad * c + 2 * tb * head_pad * o     # double-buffered x / out
    wbuf = 1 if single_buffer else 2
    resident = wbuf * ((in_pad * hid_pad + hid_pad * hid_pad + hid_pad * head_pad) * c
                       + (2 * hid_pad + head_pad) * 4)
    need = stream + resident
    # Generous headroom for compiler temps; clamp well under physical VMEM.
    return int(min(max(2 * need + (2 << 20), 8 << 20), 96 << 20))


# ---------------------------------------------------------------------------
# Forward
# ---------------------------------------------------------------------------
_SINGLE_BUFFER_WEIGHTS = None  # probed on first call: pl.Buffered(1) if supported


def encoder_forward(x, prep, *, tile_b=1024, min_grid=1):
    """Encoder forward. Returns (loc, scale).

    min_grid: 1 on single-TC chips (v5e/v6e) = one maximal batch tile;
    set 2 on v7x (2 TensorCores/chip) to split small batches across cores.
    """
    global _SINGLE_BUFFER_WEIGHTS
    arrays, meta = prep["arrays"], prep["meta"]
    B, input_dim = x.shape
    assert input_dim == meta["input_dim"]
    out_dtype = jnp.dtype(x.dtype)
    sub, in_pad = meta["sub"], meta["in_pad"]

    # Batch tile: as big as the (padded) batch allows -> amortize per-step overhead.
    tb = max(sub, min(_round_up(tile_b, sub), _round_up(B, sub)))
    if min_grid > 1 and B > sub:
        tb = min(tb, max(sub, _round_up(pl.cdiv(B, min_grid), sub)))
    Bp = _round_up(B, tb)

    xin = x.astype(meta["compute_dtype"])
    if Bp != B or in_pad != input_dim:
        xin = jnp.pad(xin, ((0, Bp - B), (0, in_pad - input_dim)))

    candidates = ([True, False] if _SINGLE_BUFFER_WEIGHTS is None
                  else [_SINGLE_BUFFER_WEIGHTS])
    last_err = None
    for sb in candidates:
        try:
            out = _encoder_pallas(
                xin, arrays["w1"], arrays["b1"], arrays["w2"], arrays["b2"],
                arrays["wh"], arrays["bh"],
                tb=tb, loc_pad=meta["loc_pad"], output_dim=meta["output_dim"],
                batch=B, out_dtype=out_dtype, single_buffer=sb,
                vmem_limit=_vmem_limit_bytes(tb, meta, out_dtype, sb))
            if len(candidates) > 1:  # probing: surface compile/run errors now
                jax.block_until_ready(out)
            _SINGLE_BUFFER_WEIGHTS = sb
            return out
        except Exception as e:  # fall back to default double-buffered weights
            last_err = e
    raise last_err


# ---------------------------------------------------------------------------
# Init + pure-JAX reference
# ---------------------------------------------------------------------------
def init_params(key, input_dim, hidden_dim, output_dim, dtype=jnp.float32):
    """Deterministic synthetic init (Kaiming-uniform-ish, like nn.Linear)."""
    ks = jax.random.split(key, 8)

    def linear(kw, kb, fan_in, fan_out):
        bound = 1.0 / jnp.sqrt(fan_in)
        w = jax.random.uniform(kw, (fan_in, fan_out), dtype, -bound, bound)
        b = jax.random.uniform(kb, (fan_out,), dtype, -bound, bound)
        return w, b

    w1, b1 = linear(ks[0], ks[1], input_dim, hidden_dim)
    w2, b2 = linear(ks[2], ks[3], hidden_dim, hidden_dim)
    wloc, bloc = linear(ks[4], ks[5], hidden_dim, output_dim)
    wscale, bscale = linear(ks[6], ks[7], hidden_dim, output_dim)
    return dict(w1=w1, b1=b1, w2=w2, b2=b2,
                wloc=wloc, bloc=bloc, wscale=wscale, bscale=bscale)


def reference_forward(x, p):
    """Pure-JAX reference of the PyTorch Encoder.forward."""
    h = jax.nn.relu(x @ p["w1"] + p["b1"])
    h = jax.nn.relu(h @ p["w2"] + p["b2"])
    loc = h @ p["wloc"] + p["bloc"]
    scale = jax.nn.softplus(h @ p["wscale"] + p["bscale"])
    return loc, scale


if __name__ == "__main__":
    input_dim, hidden_dim, output_dim = 16, 32, 8
    batch = 16

    key = jax.random.PRNGKey(0)
    kx, kp = jax.random.split(key)
    x = jax.random.normal(kx, (batch, input_dim), dtype=jnp.float32)
    params = init_params(kp, input_dim, hidden_dim, output_dim)
    loc_ref, scale_ref = reference_forward(x, params)

    # f32 path.
    prep_f32 = prepare_params(params, use_bf16=False)
    loc, scale = encoder_forward(x, prep_f32)
    jax.block_until_ready((loc, scale))
    assert loc.shape == (batch, output_dim) and scale.shape == (batch, output_dim)
    assert jnp.allclose(loc, loc_ref, atol=1e-5, rtol=1e-5)
    assert jnp.allclose(scale, scale_ref, atol=1e-5, rtol=1e-5)
    assert bool(jnp.all(scale >= 0.0))

    # bf16 MXU path (f32 accumulation + f32 epilogues): tolerance check vs reference.
    prep_bf16 = prepare_params(params, use_bf16=True)
    loc_bf, scale_bf = encoder_forward(x, prep_bf16)
    jax.block_until_ready((loc_bf, scale_bf))
    assert loc_bf.shape == (batch, output_dim) and scale_bf.shape == (batch, output_dim)
    assert jnp.allclose(loc_bf.astype(jnp.float32), loc_ref, atol=5e-2, rtol=5e-2)
    assert jnp.allclose(scale_bf.astype(jnp.float32), scale_ref, atol=5e-2, rtol=5e-2)
    assert bool(jnp.all(scale_bf >= 0.0))

    print("KERNEL_OK")
</pallas_src>

<mosaic_0001>
module attributes {stable_mosaic.version = 11 : i64} {
  func.func @encoder_kernel(%arg0: i32, %arg1: memref<16x128xf32, #tpu.memory_space<vmem>>, %arg2: memref<128x128xf32, #tpu.memory_space<vmem>>, %arg3: memref<1x128xf32, #tpu.memory_space<vmem>>, %arg4: memref<128x128xf32, #tpu.memory_space<vmem>>, %arg5: memref<1x128xf32, #tpu.memory_space<vmem>>, %arg6: memref<128x256xf32, #tpu.memory_space<vmem>>, %arg7: memref<1x256xf32, #tpu.memory_space<vmem>>, %arg8: memref<16x256xf32, #tpu.memory_space<vmem>>) attributes {dimension_semantics = [#tpu.dimension_semantics<parallel>], iteration_bounds = array<i64: 1>, scalar_prefetch = 0 : i64, scratch_operands = 0 : i64, tpu.core_type = #tpu.core_type<tc>, window_params = [{transform_indices = @transform_0, window_bounds = array<i64: 16, 128>}, {pipeline_mode = #tpu.pipeline_mode<synchronous>, transform_indices = @transform_1, window_bounds = array<i64: 128, 128>}, {pipeline_mode = #tpu.pipeline_mode<synchronous>, transform_indices = @transform_2, window_bounds = array<i64: 1, 128>}, {pipeline_mode = #tpu.pipeline_mode<synchronous>, transform_indices = @transform_3, window_bounds = array<i64: 128, 128>}, {pipeline_mode = #tpu.pipeline_mode<synchronous>, transform_indices = @transform_4, window_bounds = array<i64: 1, 128>}, {pipeline_mode = #tpu.pipeline_mode<synchronous>, transform_indices = @transform_5, window_bounds = array<i64: 128, 256>}, {pipeline_mode = #tpu.pipeline_mode<synchronous>, transform_indices = @transform_6, window_bounds = array<i64: 1, 256>}, {transform_indices = @transform_7, window_bounds = array<i64: 16, 256>}]} {
    %c0 = arith.constant 0 : index
    %c0_0 = arith.constant 0 : index
    %0 = vector.load %arg1[%c0, %c0_0] : memref<16x128xf32, #tpu.memory_space<vmem>>, vector<16x128xf32>
    %c0_1 = arith.constant 0 : index
    %c0_2 = arith.constant 0 : index
    %1 = vector.load %arg2[%c0_1, %c0_2] : memref<128x128xf32, #tpu.memory_space<vmem>>, vector<128x128xf32>
    %cst = arith.constant dense<0.000000e+00> : vector<16x128xf32>
    %2 = tpu.matmul %0, %1, %cst {dimension_numbers = #tpu.dot_dimension_numbers<[1], [0], [0], [1], [0, 0, 1, 1], [], []>} : vector<16x128xf32>, vector<128x128xf32>, vector<16x128xf32> -> vector<16x128xf32>
    %c0_3 = arith.constant 0 : index
    %c0_4 = arith.constant 0 : index
    %3 = vector.load %arg3[%c0_3, %c0_4] : memref<1x128xf32, #tpu.memory_space<vmem>>, vector<1x128xf32>
    %4 = vector.broadcast %3 : vector<1x128xf32> to vector<16x128xf32>
    %5 = arith.addf %2, %4 : vector<16x128xf32>
    %cst_5 = arith.constant 0.000000e+00 : f32
    %6 = vector.broadcast %cst_5 : f32 to vector<16x128xf32>
    %7 = arith.maximumf %5, %6 : vector<16x128xf32>
    %c0_6 = arith.constant 0 : index
    %c0_7 = arith.constant 0 : index
    %8 = vector.load %arg4[%c0_6, %c0_7] : memref<128x128xf32, #tpu.memory_space<vmem>>, vector<128x128xf32>
    %cst_8 = arith.constant dense<0.000000e+00> : vector<16x128xf32>
    %9 = tpu.matmul %7, %8, %cst_8 {dimension_numbers = #tpu.dot_dimension_numbers<[1], [0], [0], [1], [0, 0, 1, 1], [], []>} : vector<16x128xf32>, vector<128x128xf32>, vector<16x128xf32> -> vector<16x128xf32>
    %c0_9 = arith.constant 0 : index
    %c0_10 = arith.constant 0 : index
    %10 = vector.load %arg5[%c0_9, %c0_10] : memref<1x128xf32, #tpu.memory_space<vmem>>, vector<1x128xf32>
    %11 = vector.broadcast %10 : vector<1x128xf32> to vector<16x128xf32>
    %12 = arith.addf %9, %11 : vector<16x128xf32>
    %cst_11 = arith.constant 0.000000e+00 : f32
    %13 = vector.broadcast %cst_11 : f32 to vector<16x128xf32>
    %14 = arith.maximumf %12, %13 : vector<16x128xf32>
    %c0_12 = arith.constant 0 : index
    %c0_13 = arith.constant 0 : index
    %15 = vector.load %arg6[%c0_12, %c0_13] : memref<128x256xf32, #tpu.memory_space<vmem>>, vector<128x256xf32>
    %cst_14 = arith.constant dense<0.000000e+00> : vector<16x256xf32>
    %16 = tpu.matmul %14, %15, %cst_14 {dimension_numbers = #tpu.dot_dimension_numbers<[1], [0], [0], [1], [0, 0, 1, 1], [], []>} : vector<16x128xf32>, vector<128x256xf32>, vector<16x256xf32> -> vector<16x256xf32>
    %c0_15 = arith.constant 0 : index
    %c0_16 = arith.constant 0 : index
    %17 = vector.load %arg7[%c0_15, %c0_16] : memref<1x256xf32, #tpu.memory_space<vmem>>, vector<1x256xf32>
    %18 = vector.broadcast %17 : vector<1x256xf32> to vector<16x256xf32>
    %19 = arith.addf %16, %18 : vector<16x256xf32>
    %20 = vector.extract_strided_slice %19 {offsets = [0, 0], sizes = [16, 128], strides = [1, 1]} : vector<16x256xf32> to vector<16x128xf32>
    %21 = vector.extract_strided_slice %19 {offsets = [0, 128], sizes = [16, 128], strides = [1, 1]} : vector<16x256xf32> to vector<16x128xf32>
    %cst_17 = arith.constant 0.000000e+00 : f32
    %22 = vector.broadcast %cst_17 : f32 to vector<16x128xf32>
    %23 = arith.maximumf %21, %22 : vector<16x128xf32>
    %24 = math.absf %21 : vector<16x128xf32>
    %cst_18 = arith.constant 0.000000e+00 : f32
    %25 = vector.broadcast %cst_18 : f32 to vector<16x128xf32>
    %26 = arith.subf %25, %24 : vector<16x128xf32>
    %27 = math.exp %26 : vector<16x128xf32>
    %28 = math.log1p %27 : vector<16x128xf32>
    %29 = arith.addf %23, %28 : vector<16x128xf32>
    %c0_19 = arith.constant 0 : index
    %c0_20 = arith.constant 0 : index
    %30 = vector.load %arg8[%c0_19, %c0_20] : memref<16x256xf32, #tpu.memory_space<vmem>>, vector<16x128xf32>
    tpu.vector_store %arg8[%c0_19, %c0_20], %20 {strides = array<i32>} : memref<16x256xf32, #tpu.memory_space<vmem>>, vector<16x128xf32>,
    %c0_21 = arith.constant 0 : index
    %c128 = arith.constant 128 : index
    %31 = vector.load %arg8[%c0_21, %c128] : memref<16x256xf32, #tpu.memory_space<vmem>>, vector<16x128xf32>
    tpu.vector_store %arg8[%c0_21, %c128], %29 {strides = array<i32>} : memref<16x256xf32, #tpu.memory_space<vmem>>, vector<16x128xf32>,
    return
  }
  func.func @transform_0(%arg0: i32) -> (i32, i32) {
    %c0_i32 = arith.constant 0 : i32
    %c0_i32_0 = arith.constant 0 : i32
    return %arg0, %c0_i32 : i32, i32
  }
  func.func @transform_1(%arg0: i32) -> (i32, i32) {
    %c0_i32 = arith.constant 0 : i32
    %c0_i32_0 = arith.constant 0 : i32
    %c0_i32_1 = arith.constant 0 : i32
    return %c0_i32, %c0_i32_0 : i32, i32
  }
  func.func @transform_2(%arg0: i32) -> (i32, i32) {
    %c0_i32 = arith.constant 0 : i32
    %c0_i32_0 = arith.constant 0 : i32
    %c0_i32_1 = arith.constant 0 : i32
    return %c0_i32, %c0_i32_0 : i32, i32
  }
  func.func @transform_3(%arg0: i32) -> (i32, i32) {
    %c0_i32 = arith.constant 0 : i32
    %c0_i32_0 = arith.constant 0 : i32
    %c0_i32_1 = arith.constant 0 : i32
    return %c0_i32, %c0_i32_0 : i32, i32
  }
  func.func @transform_4(%arg0: i32) -> (i32, i32) {
    %c0_i32 = arith.constant 0 : i32
    %c0_i32_0 = arith.constant 0 : i32
    %c0_i32_1 = arith.constant 0 : i32
    return %c0_i32, %c0_i32_0 : i32, i32
  }
  func.func @transform_5(%arg0: i32) -> (i32, i32) {
    %c0_i32 = arith.constant 0 : i32
    %c0_i32_0 = arith.constant 0 : i32
    %c0_i32_1 = arith.constant 0 : i32
    return %c0_i32, %c0_i32_0 : i32, i32
  }
  func.func @transform_6(%arg0: i32) -> (i32, i32) {
    %c0_i32 = arith.constant 0 : i32
    %c0_i32_0 = arith.constant 0 : i32
    %c0_i32_1 = arith.constant 0 : i32
    return %c0_i32, %c0_i32_0 : i32, i32
  }
  func.func @transform_7(%arg0: i32) -> (i32, i32) {
    %c0_i32 = arith.constant 0 : i32
    %c0_i32_0 = arith.constant 0 : i32
    return %arg0, %c0_i32 : i32, i32
  }
}

module attributes {stable_mosaic.version = 11 : i64} {
  func.func @encoder_kernel(%arg0: i32, %arg1: memref<16x128xf32, #tpu.memory_space<vmem>>, %arg2: memref<128x128xf32, #tpu.memory_space<vmem>>, %arg3: memref<1x128xf32, #tpu.memory_space<vmem>>, %arg4: memref<128x128xf32, #tpu.memory_space<vmem>>, %arg5: memref<1x128xf32, #tpu.memory_space<vmem>>, %arg6: memref<128x256xf32, #tpu.memory_space<vmem>>, %arg7: memref<1x256xf32, #tpu.memory_space<vmem>>, %arg8: memref<16x256xf32, #tpu.memory_space<vmem>>) attributes {dimension_semantics = [#tpu.dimension_semantics<parallel>], iteration_bounds = array<i64: 1>, scalar_prefetch = 0 : i64, scratch_operands = 0 : i64, tpu.core_type = #tpu.core_type<tc>, window_params = [{transform_indices = @transform_0, window_bounds = array<i64: 16, 128>}, {pipeline_mode = #tpu.pipeline_mode<synchronous>, transform_indices = @transform_1, window_bounds = array<i64: 128, 128>}, {pipeline_mode = #tpu.pipeline_mode<synchronous>, transform_indices = @transform_2, window_bounds = array<i64: 1, 128>}, {pipeline_mode = #tpu.pipeline_mode<synchronous>, transform_indices = @transform_3, window_bounds = array<i64: 128, 128>}, {pipeline_mode = #tpu.pipeline_mode<synchronous>, transform_indices = @transform_4, window_bounds = array<i64: 1, 128>}, {pipeline_mode = #tpu.pipeline_mode<synchronous>, transform_indices = @transform_5, window_bounds = array<i64: 128, 256>}, {pipeline_mode = #tpu.pipeline_mode<synchronous>, transform_indices = @transform_6, window_bounds = array<i64: 1, 256>}, {transform_indices = @transform_7, window_bounds = array<i64: 16, 256>}]} {
    %c0 = arith.constant 0 : index
    %c0_0 = arith.constant 0 : index
    %0 = vector.load %arg1[%c0, %c0_0] : memref<16x128xf32, #tpu.memory_space<vmem>>, vector<16x128xf32>
    %c0_1 = arith.constant 0 : index
    %c0_2 = arith.constant 0 : index
    %1 = vector.load %arg2[%c0_1, %c0_2] : memref<128x128xf32, #tpu.memory_space<vmem>>, vector<128x128xf32>
    %cst = arith.constant dense<0.000000e+00> : vector<16x128xf32>
    %2 = tpu.matmul %0, %1, %cst {dimension_numbers = #tpu.dot_dimension_numbers<[1], [0], [0], [1], [0, 0, 1, 1], [], []>} : vector<16x128xf32>, vector<128x128xf32>, vector<16x128xf32> -> vector<16x128xf32>
    %c0_3 = arith.constant 0 : index
    %c0_4 = arith.constant 0 : index
    %3 = vector.load %arg3[%c0_3, %c0_4] : memref<1x128xf32, #tpu.memory_space<vmem>>, vector<1x128xf32>
    %4 = vector.broadcast %3 : vector<1x128xf32> to vector<16x128xf32>
    %5 = arith.addf %2, %4 : vector<16x128xf32>
    %cst_5 = arith.constant 0.000000e+00 : f32
    %6 = vector.broadcast %cst_5 : f32 to vector<16x128xf32>
    %7 = arith.maximumf %5, %6 : vector<16x128xf32>
    %c0_6 = arith.constant 0 : index
    %c0_7 = arith.constant 0 : index
    %8 = vector.load %arg4[%c0_6, %c0_7] : memref<128x128xf32, #tpu.memory_space<vmem>>, vector<128x128xf32>
    %cst_8 = arith.constant dense<0.000000e+00> : vector<16x128xf32>
    %9 = tpu.matmul %7, %8, %cst_8 {dimension_numbers = #tpu.dot_dimension_numbers<[1], [0], [0], [1], [0, 0, 1, 1], [], []>} : vector<16x128xf32>, vector<128x128xf32>, vector<16x128xf32> -> vector<16x128xf32>
    %c0_9 = arith.constant 0 : index
    %c0_10 = arith.constant 0 : index
    %10 = vector.load %arg5[%c0_9, %c0_10] : memref<1x128xf32, #tpu.memory_space<vmem>>, vector<1x128xf32>
    %11 = vector.broadcast %10 : vector<1x128xf32> to vector<16x128xf32>
    %12 = arith.addf %9, %11 : vector<16x128xf32>
    %cst_11 = arith.constant 0.000000e+00 : f32
    %13 = vector.broadcast %cst_11 : f32 to vector<16x128xf32>
    %14 = arith.maximumf %12, %13 : vector<16x128xf32>
    %c0_12 = arith.constant 0 : index
    %c0_13 = arith.constant 0 : index
    %15 = vector.load %arg6[%c0_12, %c0_13] : memref<128x256xf32, #tpu.memory_space<vmem>>, vector<128x256xf32>
    %cst_14 = arith.constant dense<0.000000e+00> : vector<16x256xf32>
    %16 = tpu.matmul %14, %15, %cst_14 {dimension_numbers = #tpu.dot_dimension_numbers<[1], [0], [0], [1], [0, 0, 1, 1], [], []>} : vector<16x128xf32>, vector<128x256xf32>, vector<16x256xf32> -> vector<16x256xf32>
    %c0_15 = arith.constant 0 : index
    %c0_16 = arith.constant 0 : index
    %17 = vector.load %arg7[%c0_15, %c0_16] : memref<1x256xf32, #tpu.memory_space<vmem>>, vector<1x256xf32>
    %18 = vector.broadcast %17 : vector<1x256xf32> to vector<16x256xf32>
    %19 = arith.addf %16, %18 : vector<16x256xf32>
    %20 = vector.extract_strided_slice %19 {offsets = [0, 0], sizes = [16, 128], strides = [1, 1]} : vector<16x256xf32> to vector<16x128xf32>
    %21 = vector.extract_strided_slice %19 {offsets = [0, 128], sizes = [16, 128], strides = [1, 1]} : vector<16x256xf32> to vector<16x128xf32>
    %cst_17 = arith.constant 0.000000e+00 : f32
    %22 = vector.broadcast %cst_17 : f32 to vector<16x128xf32>
    %23 = arith.maximumf %21, %22 : vector<16x128xf32>
    %24 = math.absf %21 : vector<16x128xf32>
    %cst_18 = arith.constant 0.000000e+00 : f32
    %25 = vector.broadcast %cst_18 : f32 to vector<16x128xf32>
    %26 = arith.subf %25, %24 : vector<16x128xf32>
    %27 = math.exp %26 : vector<16x128xf32>
    %28 = math.log1p %27 : vector<16x128xf32>
    %29 = arith.addf %23, %28 : vector<16x128xf32>
    %c0_19 = arith.constant 0 : index
    %c0_20 = arith.constant 0 : index
    %30 = vector.load %arg8[%c0_19, %c0_20] : memref<16x256xf32, #tpu.memory_space<vmem>>, vector<16x128xf32>
    tpu.vector_store %arg8[%c0_19, %c0_20], %20 {strides = array<i32>} : memref<16x256xf32, #tpu.memory_space<vmem>>, vector<16x128xf32>,
    %c0_21 = arith.constant 0 : index
    %c128 = arith.constant 128 : index
    %31 = vector.load %arg8[%c0_21, %c128] : memref<16x256xf32, #tpu.memory_space<vmem>>, vector<16x128xf32>
    tpu.vector_store %arg8[%c0_21, %c128], %29 {strides = array<i32>} : memref<16x256xf32, #tpu.memory_space<vmem>>, vector<16x128xf32>,
    return
  }
  func.func @transform_0(%arg0: i32) -> (i32, i32) {
    %c0_i32 = arith.constant 0 : i32
    %c0_i32_0 = arith.constant 0 : i32
    return %arg0, %c0_i32 : i32, i32
  }
  func.func @transform_1(%arg0: i32) -> (i32, i32) {
    %c0_i32 = arith.constant 0 : i32
    %c0_i32_0 = arith.constant 0 : i32
    %c0_i32_1 = arith.constant 0 : i32
    return %c0_i32, %c0_i32_0 : i32, i32
  }
  func.func @transform_2(%arg0: i32) -> (i32, i32) {
    %c0_i32 = arith.constant 0 : i32
    %c0_i32_0 = arith.constant 0 : i32
    %c0_i32_1 = arith.constant 0 : i32
    return %c0_i32, %c0_i32_0 : i32, i32
  }
  func.func @transform_3(%arg0: i32) -> (i32, i32) {
    %c0_i32 = arith.constant 0 : i32
    %c0_i32_0 = arith.constant 0 : i32
    %c0_i32_1 = arith.constant 0 : i32
    return %c0_i32, %c0_i32_0 : i32, i32
  }
  func.func @transform_4(%arg0: i32) -> (i32, i32) {
    %c0_i32 = arith.constant 0 : i32
    %c0_i32_0 = arith.constant 0 : i32
    %c0_i32_1 = arith.constant 0 : i32
    return %c0_i32, %c0_i32_0 : i32, i32
  }
  func.func @transform_5(%arg0: i32) -> (i32, i32) {
    %c0_i32 = arith.constant 0 : i32
    %c0_i32_0 = arith.constant 0 : i32
    %c0_i32_1 = arith.constant 0 : i32
    return %c0_i32, %c0_i32_0 : i32, i32
  }
  func.func @transform_6(%arg0: i32) -> (i32, i32) {
    %c0_i32 = arith.constant 0 : i32
    %c0_i32_0 = arith.constant 0 : i32
    %c0_i32_1 = arith.constant 0 : i32
    return %c0_i32, %c0_i32_0 : i32, i32
  }
  func.func @transform_7(%arg0: i32) -> (i32, i32) {
    %c0_i32 = arith.constant 0 : i32
    %c0_i32_0 = arith.constant 0 : i32
    return %arg0, %c0_i32 : i32, i32
  }
}

</mosaic_0001>

<llo_original>
// kernel: _encoder_pallas.1
$region0: #{_encoder_pallas.1}
  #allocation0 [shape = 'u32[]', space=smem, size = 0x4, offset = 0x4, fixed_abs, tag = 'smem constant byte address 0x4 - core index']
  #allocation1 [shape = 'u32[144,128]{1,0:T(1,128)}', space=vmem, size = 0x12000, scoped, tag = 'internal scratch']
  %s0 = inlined_call_operand.hbm [shape: f32[16,128], index: 0, kind: input, shape index: {}]
  %s1 = inlined_call_operand.hbm [shape: f32[128,128], index: 1, kind: input, shape index: {}]
  %s2 = inlined_call_operand.vmem [shape: f32[1,128], index: 2, kind: input, shape index: {}]
  %s3 = inlined_call_operand.hbm [shape: f32[128,128], index: 3, kind: input, shape index: {}]
  %s4 = inlined_call_operand.vmem [shape: f32[1,128], index: 4, kind: input, shape index: {}]
  %s5 = inlined_call_operand.hbm [shape: f32[128,256], index: 5, kind: input, shape index: {}]
  %s6 = inlined_call_operand.vmem [shape: f32[1,256], index: 6, kind: input, shape index: {}]
  %s7 = inlined_call_operand.vmem [shape: f32[16,256], index: 7, kind: output, shape index: {}]
  %s8 = sld [smem:[#allocation0]]
  $region54: #{_encoder_pallas.1} parent=0
    _
  %s10 = ssub.s32 1, %s8
  %s11 = scalar_select 0, %s10, %s8
  $region1: #{_encoder_pallas.1} parent=0
    #allocation2 [shape = 'u8[8192]{0}', space=vmem, size = 0x2000, scoped, tag = 'input window, operand 0, single buffered']
    #allocation3 [shape = 's32[1]{0}', space=sflag, size = 0x4, scoped, tag = 'scoped memory for _encoder_pallas.1']
    #allocation4 [shape = 'u8[65536]{0}', space=vmem, size = 0x10000, scoped, tag = 'input window, operand 1, single buffered']
    #allocation5 [shape = 's32[1]{0}', space=sflag, size = 0x4, scoped, tag = 'scoped memory for _encoder_pallas.1']
    #allocation6 [shape = 'u8[65536]{0}', space=vmem, size = 0x10000, scoped, tag = 'input window, operand 3, single buffered']
    #allocation7 [shape = 'u8[131072]{0}', space=vmem, size = 0x20000, scoped, tag = 'input window, operand 5, single buffered']
    #allocation8 [shape = 's32[1]{0}', space=sflag, size = 0x4, scoped, tag = 'scoped memory for _encoder_pallas.1']
    %12 = vsyncpa [#allocation3], 0
    %13 = vsyncpa [#allocation5], 0
    %14 = vsyncpa [#allocation8], 0
    // Predicated region
    $region2: #{_encoder_pallas.1} parent=1 // pred_check
      _
    $region3: #{_encoder_pallas.1} parent=1 // pred_check_branch
      %16 = sbr.rel (0) target = $region5
    $region4: #{_encoder_pallas.1} parent=1 // pred_region
      %s18 = ssub.s32 256, 256
      %19 = vsyncadd [#allocation3], %s18
      %s20 = sshll.u32 [#allocation2], 4
      %s21 = int_to_ptr.vmem [resolvable:$true] %s20
      %26 = dma.hbm_to_vmem [thread:$0]  %s0, 256, %s21, [#allocation3], 128, 128, 8
    $region5: #{_encoder_pallas.1} parent=1 // pred_fallthru
      _
    // Predicated region
    $region6: #{_encoder_pallas.1} parent=1 // pred_check
      _
    $region7: #{_encoder_pallas.1} parent=1 // pred_check_branch
      %28 = sbr.rel (0) target = $region9
    $region8: #{_encoder_pallas.1} parent=1 // pred_region
      %s30 = ssub.s32 2048, 2048
      %31 = vsyncadd [#allocation5], %s30
      %s32 = sshll.u32 [#allocation4], 4
      %s33 = int_to_ptr.vmem [resolvable:$true] %s32
      %38 = dma.hbm_to_vmem [thread:$0]  %s1, 2048, %s33, [#allocation5], 128, 128, 8
    $region9: #{_encoder_pallas.1} parent=1 // pred_fallthru
      _
    // Predicated region
    $region10: #{_encoder_pallas.1} parent=1 // pred_check
      _
    $region11: #{_encoder_pallas.1} parent=1 // pred_check_branch
      %40 = sbr.rel (0) target = $region13
    $region12: #{_encoder_pallas.1} parent=1 // pred_region
      _
    $region13: #{_encoder_pallas.1} parent=1 // pred_fallthru
      _
    // Predicated region
    $region14: #{_encoder_pallas.1} parent=1 // pred_check
      _
    $region15: #{_encoder_pallas.1} parent=1 // pred_check_branch
      %42 = sbr.rel (0) target = $region17
    $region16: #{_encoder_pallas.1} parent=1 // pred_region
      %s44 = ssub.s32 2048, 2048
      %45 = vsyncadd [#allocation5], %s44
      %s46 = sshll.u32 [#allocation6], 4
      %s47 = int_to_ptr.vmem [resolvable:$true] %s46
      %52 = dma.hbm_to_vmem [thread:$0]  %s3, 2048, %s47, [#allocation5], 128, 128, 8
    $region17: #{_encoder_pallas.1} parent=1 // pred_fallthru
      _
    // Predicated region
    $region18: #{_encoder_pallas.1} parent=1 // pred_check
      _
    $region19: #{_encoder_pallas.1} parent=1 // pred_check_branch
      %54 = sbr.rel (0) target = $region21
    $region20: #{_encoder_pallas.1} parent=1 // pred_region
      _
    $region21: #{_encoder_pallas.1} parent=1 // pred_fallthru
      _
    // Predicated region
    $region22: #{_encoder_pallas.1} parent=1 // pred_check
      _
    $region23: #{_encoder_pallas.1} parent=1 // pred_check_branch
      %56 = sbr.rel (0) target = $region25
    $region24: #{_encoder_pallas.1} parent=1 // pred_region
      %s58 = ssub.s32 4096, 4096
      %59 = vsyncadd [#allocation8], %s58
      %s60 = sshll.u32 [#allocation7], 4
      %s61 = int_to_ptr.vmem [resolvable:$true] %s60
      %66 = dma.hbm_to_vmem [thread:$0]  %s5, 4096, %s61, [#allocation8], 256, 256, 16
    $region25: #{_encoder_pallas.1} parent=1 // pred_fallthru
      _
    // Predicated region
    $region26: #{_encoder_pallas.1} parent=1 // pred_check
      _
    $region27: #{_encoder_pallas.1} parent=1 // pred_check_branch
      %68 = sbr.rel (0) target = $region29
    $region28: #{_encoder_pallas.1} parent=1 // pred_region
      _
    $region29: #{_encoder_pallas.1} parent=1 // pred_fallthru
      _
    // Predicated region
    $region30: #{_encoder_pallas.1} parent=1 // pred_check
      _
    $region31: #{_encoder_pallas.1} parent=1 // pred_check_branch
      %70 = sbr.rel (0) target = $region33
    $region32: #{_encoder_pallas.1} parent=1 // pred_region
      %71 = dma.done [#allocation3], 256
    $region33: #{_encoder_pallas.1} parent=1 // pred_fallthru
      _
    // Predicated region
    $region34: #{_encoder_pallas.1} parent=1 // pred_check
      _
    $region35: #{_encoder_pallas.1} parent=1 // pred_check_branch
      %73 = sbr.rel (0) target = $region37
    $region36: #{_encoder_pallas.1} parent=1 // pred_region
      %74 = dma.done [#allocation5], 2048
    $region37: #{_encoder_pallas.1} parent=1 // pred_fallthru
      _
    // Predicated region
    $region38: #{_encoder_pallas.1} parent=1 // pred_check
      _
    $region39: #{_encoder_pallas.1} parent=1 // pred_check_branch
      %76 = sbr.rel (0) target = $region41
    $region40: #{_encoder_pallas.1} parent=1 // pred_region
      %77 = dma.done [#allocation5], 2048
    $region41: #{_encoder_pallas.1} parent=1 // pred_fallthru
      _
    // Predicated region
    $region42: #{_encoder_pallas.1} parent=1 // pred_check
      _
    $region43: #{_encoder_pallas.1} parent=1 // pred_check_branch
      %79 = sbr.rel (0) target = $region45
    $region44: #{_encoder_pallas.1} parent=1 // pred_region
      %80 = dma.done [#allocation8], 4096
    $region45: #{_encoder_pallas.1} parent=1 // pred_fallthru
      _
    %v81 = vld [vmem:[#allocation2] sm:$0xff]
    %v82 = vld [vmem:[#allocation2 + $0x8] sm:$0xff]
    %v83 = vld [vmem:[#allocation4] sm:$0xff]
    %v84 = vld [vmem:[#allocation4 + $0x8] sm:$0xff]
    %v85 = vld [vmem:[#allocation4 + $0x10] sm:$0xff]
    %v86 = vld [vmem:[#allocation4 + $0x18] sm:$0xff]
    %v87 = vld [vmem:[#allocation4 + $0x20] sm:$0xff]
    %v88 = vld [vmem:[#allocation4 + $0x28] sm:$0xff]
    %v89 = vld [vmem:[#allocation4 + $0x30] sm:$0xff]
    %v90 = vld [vmem:[#allocation4 + $0x38] sm:$0xff]
    %v91 = vld [vmem:[#allocation4 + $0x40] sm:$0xff]
    %v92 = vld [vmem:[#allocation4 + $0x48] sm:$0xff]
    %v93 = vld [vmem:[#allocation4 + $0x50] sm:$0xff]
    %v94 = vld [vmem:[#allocation4 + $0x58] sm:$0xff]
    %v95 = vld [vmem:[#allocation4 + $0x60] sm:$0xff]
    %v96 = vld [vmem:[#allocation4 + $0x68] sm:$0xff]
    %v97 = vld [vmem:[#allocation4 + $0x70] sm:$0xff]
    %v98 = vld [vmem:[#allocation4 + $0x78] sm:$0xff]
    %v99 = vld [vmem:[%s2] sm:$0x1]
    %v101 = vlaneseq
    %v102 = vshrl.u32 %v101, 7
    %v103 = vsub.s32 0, %v102
    %v104 = vrot.slane %v99, %v103
    %106 = vmatprep.subr.mxu0 0.0
    %107 = vmatpush1.msra.mxu0 %v98
    %108 = vmatprep.subr.mxu0 0.0
    %109 = vmatpush1.msra.mxu0 %v97
    %110 = vmatprep.subr.mxu0 0.0
    %111 = vmatpush1.msra.mxu0 %v96
    %112 = vmatprep.subr.mxu0 0.0
    %113 = vmatpush1.msra.mxu0 %v95
    %114 = vmatprep.subr.mxu0 0.0
    %115 = vmatpush1.msra.mxu0 %v94
    %116 = vmatprep.subr.mxu0 0.0
    %117 = vmatpush1.msra.mxu0 %v93
    %118 = vmatprep.subr.mxu0 0.0
    %119 = vmatpush1.msra.mxu0 %v92
    %120 = vmatprep.subr.mxu0 0.0
    %121 = vmatpush1.msra.mxu0 %v91
    %122 = vmatprep.subr.mxu0 0.0
    %123 = vmatpush1.msra.mxu0 %v90
    %124 = vmatprep.subr.mxu0 0.0
    %125 = vmatpush1.msra.mxu0 %v89
    %126 = vmatprep.subr.mxu0 0.0
    %127 = vmatpush1.msra.mxu0 %v88
    %128 = vmatprep.subr.mxu0 0.0
    %129 = vmatpush1.msra.mxu0 %v87
    %130 = vmatprep.subr.mxu0 0.0
    %131 = vmatpush1.msra.mxu0 %v86
    %132 = vmatprep.subr.mxu0 0.0
    %133 = vmatpush1.msra.mxu0 %v85
    %134 = vmatprep.subr.mxu0 0.0
    %135 = vmatpush1.msra.mxu0 %v84
    %136 = vmatprep.subr.mxu0 0.0
    %137 = vmatpush1.msra.mxu0 %v83
    %138 = vmatprep.subr.mxu0 0.0
    %139 = vmatpush2.msra.mxu0 0.0
    %140 = vmatprep.subr.mxu0 0.0
    %141 = vmatpush2.msra.mxu0 0.0
    %142 = vmatprep.subr.mxu0 0.0
    %143 = vmatpush2.msra.mxu0 0.0
    %144 = vmatprep.subr.mxu0 0.0
    %145 = vmatpush2.msra.mxu0 0.0
    %146 = vmatprep.subr.mxu0 0.0
    %147 = vmatpush2.msra.mxu0 0.0
    %148 = vmatprep.subr.mxu0 0.0
    %149 = vmatpush2.msra.mxu0 0.0
    %150 = vmatprep.subr.mxu0 0.0
    %151 = vmatpush2.msra.mxu0 0.0
    %152 = vmatprep.subr.mxu0 0.0
    %153 = vmatpush2.msra.mxu0 0.0
    %154 = vmatprep.subr.mxu0 0.0
    %155 = vmatpush2.msra.mxu0 0.0
    %156 = vmatprep.subr.mxu0 0.0
    %157 = vmatpush2.msra.mxu0 0.0
    %158 = vmatprep.subr.mxu0 0.0
    %159 = vmatpush2.msra.mxu0 0.0
    %160 = vmatprep.subr.mxu0 0.0
    %161 = vmatpush2.msra.mxu0 0.0
    %162 = vmatprep.subr.mxu0 0.0
    %163 = vmatpush2.msra.mxu0 0.0
    %164 = vmatprep.subr.mxu0 0.0
    %165 = vmatpush2.msra.mxu0 0.0
    %166 = vmatprep.subr.mxu0 0.0
    %167 = vmatpush2.msra.mxu0 0.0
    %168 = vmatprep.subr.mxu0 0.0
    %169 = vmatpush2.msra.mxu0 0.0
    %170 = vmatprep.mubr.f32.mxu0 0.0
    %171 = vmatmul.mubr.f32.gmra.mxu0 %v81
    %v172 = vpop.f32.mrf.mxu0
    %v173 = vadd.f32 %v104, %v172
    %v174 = vpop.f32.mrf.mxu0
    %175 = vmatprep.mubr.f32.mxu0 0.0
    %176 = vmatmul.mubr.f32.gmra.mxu0 %v82
    %v177 = vpop.f32.mrf.mxu0
    %v178 = vadd.f32 %v104, %v177
    %v179 = vpop.f32.mrf.mxu0
    %180 = vdwg.mxu0
    %v181 = vmax.f32 %v173, 0.0
    %v182 = vmax.f32 %v178, 0.0
    %v183 = vld [vmem:[#allocation6] sm:$0xff]
    %v184 = vld [vmem:[#allocation6 + $0x8] sm:$0xff]
    %v185 = vld [vmem:[#allocation6 + $0x10] sm:$0xff]
    %v186 = vld [vmem:[#allocation6 + $0x18] sm:$0xff]
    %v187 = vld [vmem:[#allocation6 + $0x20] sm:$0xff]
    %v188 = vld [vmem:[#allocation6 + $0x28] sm:$0xff]
    %v189 = vld [vmem:[#allocation6 + $0x30] sm:$0xff]
    %v190 = vld [vmem:[#allocation6 + $0x38] sm:$0xff]
    %v191 = vld [vmem:[#allocation6 + $0x40] sm:$0xff]
    %v192 = vld [vmem:[#allocation6 + $0x48] sm:$0xff]
    %v193 = vld [vmem:[#allocation6 + $0x50] sm:$0xff]
    %v194 = vld [vmem:[#allocation6 + $0x58] sm:$0xff]
    %v195 = vld [vmem:[#allocation6 + $0x60] sm:$0xff]
    %v196 = vld [vmem:[#allocation6 + $0x68] sm:$0xff]
    %v197 = vld [vmem:[#allocation6 + $0x70] sm:$0xff]
    %v198 = vld [vmem:[#allocation6 + $0x78] sm:$0xff]
    %v199 = vld [vmem:[%s4] sm:$0x1]
    %v201 = vlaneseq
    %v202 = vshrl.u32 %v201, 7
    %v203 = vsub.s32 0, %v202
    %v204 = vrot.slane %v199, %v203
    %206 = vmatprep.subr.mxu0 0.0
    %207 = vmatpush1.msra.mxu0 %v198
    %208 = vmatprep.subr.mxu0 0.0
    %209 = vmatpush1.msra.mxu0 %v197
    %210 = vmatprep.subr.mxu0 0.0
    %211 = vmatpush1.msra.mxu0 %v196
    %212 = vmatprep.subr.mxu0 0.0
    %213 = vmatpush1.msra.mxu0 %v195
    %214 = vmatprep.subr.mxu0 0.0
    %215 = vmatpush1.msra.mxu0 %v194
    %216 = vmatprep.subr.mxu0 0.0
    %217 = vmatpush1.msra.mxu0 %v193
    %218 = vmatprep.subr.mxu0 0.0
    %219 = vmatpush1.msra.mxu0 %v192
    %220 = vmatprep.subr.mxu0 0.0
    %221 = vmatpush1.msra.mxu0 %v191
    %222 = vmatprep.subr.mxu0 0.0
    %223 = vmatpush1.msra.mxu0 %v190
    %224 = vmatprep.subr.mxu0 0.0
    %225 = vmatpush1.msra.mxu0 %v189
    %226 = vmatprep.subr.mxu0 0.0
    %227 = vmatpush1.msra.mxu0 %v188
    %228 = vmatprep.subr.mxu0 0.0
    %229 = vmatpush1.msra.mxu0 %v187
    %230 = vmatprep.subr.mxu0 0.0
    %231 = vmatpush1.msra.mxu0 %v186
    %232 = vmatprep.subr.mxu0 0.0
    %233 = vmatpush1.msra.mxu0 %v185
    %234 = vmatprep.subr.mxu0 0.0
    %235 = vmatpush1.msra.mxu0 %v184
    %236 = vmatprep.subr.mxu0 0.0
    %237 = vmatpush1.msra.mxu0 %v183
    %238 = vmatprep.subr.mxu0 0.0
    %239 = vmatpush2.msra.mxu0 0.0
    %240 = vmatprep.subr.mxu0 0.0
    %241 = vmatpush2.msra.mxu0 0.0
    %242 = vmatprep.subr.mxu0 0.0
    %243 = vmatpush2.msra.mxu0 0.0
    %244 = vmatprep.subr.mxu0 0.0
    %245 = vmatpush2.msra.mxu0 0.0
    %246 = vmatprep.subr.mxu0 0.0
    %247 = vmatpush2.msra.mxu0 0.0
    %248 = vmatprep.subr.mxu0 0.0
    %249 = vmatpush2.msra.mxu0 0.0
    %250 = vmatprep.subr.mxu0 0.0
    %251 = vmatpush2.msra.mxu0 0.0
    %252 = vmatprep.subr.mxu0 0.0
    %253 = vmatpush2.msra.mxu0 0.0
    %254 = vmatprep.subr.mxu0 0.0
    %255 = vmatpush2.msra.mxu0 0.0
    %256 = vmatprep.subr.mxu0 0.0
    %257 = vmatpush2.msra.mxu0 0.0
    %258 = vmatprep.subr.mxu0 0.0
    %259 = vmatpush2.msra.mxu0 0.0
    %260 = vmatprep.subr.mxu0 0.0
    %261 = vmatpush2.msra.mxu0 0.0
    %262 = vmatprep.subr.mxu0 0.0
    %263 = vmatpush2.msra.mxu0 0.0
    %264 = vmatprep.subr.mxu0 0.0
    %265 = vmatpush2.msra.mxu0 0.0
    %266 = vmatprep.subr.mxu0 0.0
    %267 = vmatpush2.msra.mxu0 0.0
    %268 = vmatprep.subr.mxu0 0.0
    %269 = vmatpush2.msra.mxu0 0.0
    %270 = vmatprep.mubr.f32.mxu0 0.0
    %271 = vmatmul.mubr.f32.gmra.mxu0 %v181
    %v272 = vpop.f32.mrf.mxu0
    %v273 = vadd.f32 %v204, %v272
    %v274 = vpop.f32.mrf.mxu0
    %275 = vmatprep.mubr.f32.mxu0 0.0
    %276 = vmatmul.mubr.f32.gmra.mxu0 %v182
    %v277 = vpop.f32.mrf.mxu0
    %v278 = vadd.f32 %v204, %v277
    %v279 = vpop.f32.mrf.mxu0
    %280 = vdwg.mxu0
    %v281 = vmax.f32 %v273, 0.0
    %v282 = vmax.f32 %v278, 0.0
    %v283 = vld [vmem:[#allocation7] sm:$0xff]
    %v284 = vld [vmem:[#allocation7 + $0x8] sm:$0xff]
    %v285 = vld [vmem:[#allocation7 + $0x10] sm:$0xff]
    %v286 = vld [vmem:[#allocation7 + $0x18] sm:$0xff]
    %v287 = vld [vmem:[#allocation7 + $0x20] sm:$0xff]
    %v288 = vld [vmem:[#allocation7 + $0x28] sm:$0xff]
    %v289 = vld [vmem:[#allocation7 + $0x30] sm:$0xff]
    %v290 = vld [vmem:[#allocation7 + $0x38] sm:$0xff]
    %v291 = vld [vmem:[#allocation7 + $0x40] sm:$0xff]
    %v292 = vld [vmem:[#allocation7 + $0x48] sm:$0xff]
    %v293 = vld [vmem:[#allocation7 + $0x50] sm:$0xff]
    %v294 = vld [vmem:[#allocation7 + $0x58] sm:$0xff]
    %v295 = vld [vmem:[#allocation7 + $0x60] sm:$0xff]
    %v296 = vld [vmem:[#allocation7 + $0x68] sm:$0xff]
    %v297 = vld [vmem:[#allocation7 + $0x70] sm:$0xff]
    %v298 = vld [vmem:[#allocation7 + $0x78] sm:$0xff]
    %v299 = vld [vmem:[#allocation7 + $0x80] sm:$0xff]
    %v300 = vld [vmem:[#allocation7 + $0x88] sm:$0xff]
    %v301 = vld [vmem:[#allocation7 + $0x90] sm:$0xff]
    %v302 = vld [vmem:[#allocation7 + $0x98] sm:$0xff]
    %v303 = vld [vmem:[#allocation7 + $0xa0] sm:$0xff]
    %v304 = vld [vmem:[#allocation7 + $0xa8] sm:$0xff]
    %v305 = vld [vmem:[#allocation7 + $0xb0] sm:$0xff]
    %v306 = vld [vmem:[#allocation7 + $0xb8] sm:$0xff]
    %v307 = vld [vmem:[#allocation7 + $0xc0] sm:$0xff]
    %v308 = vld [vmem:[#allocation7 + $0xc8] sm:$0xff]
    %v309 = vld [vmem:[#allocation7 + $0xd0] sm:$0xff]
    %v310 = vld [vmem:[#allocation7 + $0xd8] sm:$0xff]
    %v311 = vld [vmem:[#allocation7 + $0xe0] sm:$0xff]
    %v312 = vld [vmem:[#allocation7 + $0xe8] sm:$0xff]
    %v313 = vld [vmem:[#allocation7 + $0xf0] sm:$0xff]
    %v314 = vld [vmem:[#allocation7 + $0xf8] sm:$0xff]
    %v315 = vld [vmem:[%s6] sm:$0x3]
    %v317 = vlaneseq
    %v318 = vshrl.u32 %v317, 7
    %v319 = vsub.s32 0, %v318
    %v320 = vrot.slane %v315, %v319
    %v321 = vlaneseq
    %v322 = vshrl.u32 %v321, 7
    %v323 = vsub.s32 1, %v322
    %v324 = vrot.slane %v315, %v323
    %327 = vmatprep.subr.mxu0 %v314
    %328 = vmatpush1.msra.mxu0 %v313
    %329 = vmatprep.subr.mxu0 %v312
    %330 = vmatpush1.msra.mxu0 %v311
    %331 = vmatprep.subr.mxu0 %v310
    %332 = vmatpush1.msra.mxu0 %v309
    %333 = vmatprep.subr.mxu0 %v308
    %334 = vmatpush1.msra.mxu0 %v307
    %335 = vmatprep.subr.mxu0 %v306
    %336 = vmatpush1.msra.mxu0 %v305
    %337 = vmatprep.subr.mxu0 %v304
    %338 = vmatpush1.msra.mxu0 %v303
    %339 = vmatprep.subr.mxu0 %v302
    %340 = vmatpush1.msra.mxu0 %v301
    %341 = vmatprep.subr.mxu0 %v300
    %342 = vmatpush1.msra.mxu0 %v299
    %343 = vmatprep.subr.mxu0 %v298
    %344 = vmatpush1.msra.mxu0 %v297
    %345 = vmatprep.subr.mxu0 %v296
    %346 = vmatpush1.msra.mxu0 %v295
    %347 = vmatprep.subr.mxu0 %v294
    %348 = vmatpush1.msra.mxu0 %v293
    %349 = vmatprep.subr.mxu0 %v292
    %350 = vmatpush1.msra.mxu0 %v291
    %351 = vmatprep.subr.mxu0 %v290
    %352 = vmatpush1.msra.mxu0 %v289
    %353 = vmatprep.subr.mxu0 %v288
    %354 = vmatpush1.msra.mxu0 %v287
    %355 = vmatprep.subr.mxu0 %v286
    %356 = vmatpush1.msra.mxu0 %v285
    %357 = vmatprep.subr.mxu0 %v284
    %358 = vmatpush1.msra.mxu0 %v283
    %359 = vmatprep.subr.mxu0 0.0
    %360 = vmatpush2.msra.mxu0 0.0
    %361 = vmatprep.subr.mxu0 0.0
    %362 = vmatpush2.msra.mxu0 0.0
    %363 = vmatprep.subr.mxu0 0.0
    %364 = vmatpush2.msra.mxu0 0.0
    %365 = vmatprep.subr.mxu0 0.0
    %366 = vmatpush2.msra.mxu0 0.0
    %367 = vmatprep.subr.mxu0 0.0
    %368 = vmatpush2.msra.mxu0 0.0
    %369 = vmatprep.subr.mxu0 0.0
    %370 = vmatpush2.msra.mxu0 0.0
    %371 = vmatprep.subr.mxu0 0.0
    %372 = vmatpush2.msra.mxu0 0.0
    %373 = vmatprep.subr.mxu0 0.0
    %374 = vmatpush2.msra.mxu0 0.0
    %375 = vmatprep.subr.mxu0 0.0
    %376 = vmatpush2.msra.mxu0 0.0
    %377 = vmatprep.subr.mxu0 0.0
    %378 = vmatpush2.msra.mxu0 0.0
    %379 = vmatprep.subr.mxu0 0.0
    %380 = vmatpush2.msra.mxu0 0.0
    %381 = vmatprep.subr.mxu0 0.0
    %382 = vmatpush2.msra.mxu0 0.0
    %383 = vmatprep.subr.mxu0 0.0
    %384 = vmatpush2.msra.mxu0 0.0
    %385 = vmatprep.subr.mxu0 0.0
    %386 = vmatpush2.msra.mxu0 0.0
    %387 = vmatprep.subr.mxu0 0.0
    %388 = vmatpush2.msra.mxu0 0.0
    %389 = vmatprep.subr.mxu0 0.0
    %390 = vmatpush2.msra.mxu0 0.0
    %391 = vmatprep.mubr.f32.mxu0 0.0
    %392 = vmatmul.mubr.f32.gmra.mxu0 %v281
    %v393 = vpop.f32.mrf.mxu0
    %v394 = vadd.f32 %v320, %v393
    %v395 = vpop.f32.mrf.mxu0
    %v396 = vadd.f32 %v324, %v395
    %397 = vmatprep.mubr.f32.mxu0 0.0
    %398 = vmatmul.mubr.f32.gmra.mxu0 %v282
    %v399 = vpop.f32.mrf.mxu0
    %v400 = vadd.f32 %v320, %v399
    %v401 = vpop.f32.mrf.mxu0
    %v402 = vadd.f32 %v324, %v401
    %403 = vdwg.mxu0
    %v404 = vmax.f32 %v396, 0.0
    %v405 = vmax.f32 %v402, 0.0
    %v406 = vand.u32 2147483647, %v396
    %v407 = vand.u32 2147483647, %v402
    %v408 = vsub.f32 0.0, %v406
    %v409 = vsub.f32 0.0, %v407
    %v410 = vmul.f32 %v408, 1.442695
    %v411 = vpow.pop %v410
    %v412 = vmul.f32 %v409, 1.442695
    %v413 = vpow.pop %v412
    %v414 = vadd.f32 %v411, 1.0
    %v415 = vlog2.pop %v414
    %v416 = vmul.f32 %v415, 0.6931472
    %v417 = vmul.f32 -0.5, %v411
    %v418 = vadd.f32 %v417, 1.0
    %v419 = vmul.f32 %v418, %v411
    %v420 = vand.u32 2147483647, %v411
    %vm421 = vcmp.lt.f32.partialorder %v420, 0.0004427343
    %v422 = vsel %vm421, %v419, %v416
    %v423 = vadd.f32 %v413, 1.0
    %v424 = vlog2.pop %v423
    %v425 = vmul.f32 %v424, 0.6931472
    %v426 = vmul.f32 -0.5, %v413
    %v427 = vadd.f32 %v426, 1.0
    %v428 = vmul.f32 %v427, %v413
    %v429 = vand.u32 2147483647, %v413
    %vm430 = vcmp.lt.f32.partialorder %v429, 0.0004427343
    %v431 = vsel %vm430, %v428, %v425
    %v432 = vadd.f32 %v404, %v422
    %v433 = vadd.f32 %v405, %v431
    %434 = vst [vmem:[%s7] sm:$0xff] %v394
    %435 = vst [vmem:[%s7 + $0x10] sm:$0xff] %v400
    %436 = vst [vmem:[%s7 + $0x8] sm:$0xff] %v432
    %437 = vst [vmem:[%s7 + $0x18] sm:$0xff] %v433
    // Predicated region
    $region46: #{_encoder_pallas.1} parent=1 // pred_check
      _
    $region47: #{_encoder_pallas.1} parent=1 // pred_check_branch
      %439 = sbr.rel (0) target = $region49
    $region48: #{_encoder_pallas.1} parent=1 // pred_region
      _
    $region49: #{_encoder_pallas.1} parent=1 // pred_fallthru
      _
    // Predicated region
    $region50: #{_encoder_pallas.1} parent=1 // pred_check
      _
    $region51: #{_encoder_pallas.1} parent=1 // pred_check_branch
      %441 = sbr.rel (0) target = $region53
    $region52: #{_encoder_pallas.1} parent=1 // pred_region
      _
    $region53: #{_encoder_pallas.1} parent=1 // pred_fallthru
      _
    %442 = vsyncpa [#allocation3], 1
    %443 = vsyncpa [#allocation5], 1
    %444 = vsyncpa [#allocation8], 1

// kernel: _encoder_pallas.1
$region0: #{_encoder_pallas.1}
  #allocation0 [shape = 'u32[]', space=smem, size = 0x4, offset = 0x4, fixed_abs, tag = 'smem constant byte address 0x4 - core index']
  #allocation1 [shape = 'u32[144,128]{1,0:T(1,128)}', space=vmem, size = 0x12000, scoped, tag = 'internal scratch']
  %s0 = inlined_call_operand.hbm [shape: f32[16,128], index: 0, kind: input, shape index: {}]
  %s1 = inlined_call_operand.hbm [shape: f32[128,128], index: 1, kind: input, shape index: {}]
  %s2 = inlined_call_operand.vmem [shape: f32[1,128], index: 2, kind: input, shape index: {}]
  %s3 = inlined_call_operand.hbm [shape: f32[128,128], index: 3, kind: input, shape index: {}]
  %s4 = inlined_call_operand.vmem [shape: f32[1,128], index: 4, kind: input, shape index: {}]
  %s5 = inlined_call_operand.hbm [shape: f32[128,256], index: 5, kind: input, shape index: {}]
  %s6 = inlined_call_operand.vmem [shape: f32[1,256], index: 6, kind: input, shape index: {}]
  %s7 = inlined_call_operand.vmem [shape: f32[16,256], index: 7, kind: output, shape index: {}]
  %s8 = sld [smem:[#allocation0]]
  $region54: #{_encoder_pallas.1} parent=0
    _
  %s10 = ssub.s32 1, %s8
  %s11 = scalar_select 0, %s10, %s8
  $region1: #{_encoder_pallas.1} parent=0
    #allocation2 [shape = 'u8[8192]{0}', space=vmem, size = 0x2000, scoped, tag = 'input window, operand 0, single buffered']
    #allocation3 [shape = 's32[1]{0}', space=sflag, size = 0x4, scoped, tag = 'scoped memory for _encoder_pallas.1']
    #allocation4 [shape = 'u8[65536]{0}', space=vmem, size = 0x10000, scoped, tag = 'input window, operand 1, single buffered']
    #allocation5 [shape = 's32[1]{0}', space=sflag, size = 0x4, scoped, tag = 'scoped memory for _encoder_pallas.1']
    #allocation6 [shape = 'u8[65536]{0}', space=vmem, size = 0x10000, scoped, tag = 'input window, operand 3, single buffered']
    #allocation7 [shape = 'u8[131072]{0}', space=vmem, size = 0x20000, scoped, tag = 'input window, operand 5, single buffered']
    #allocation8 [shape = 's32[1]{0}', space=sflag, size = 0x4, scoped, tag = 'scoped memory for _encoder_pallas.1']
    %12 = vsyncpa [#allocation3], 0
    %13 = vsyncpa [#allocation5], 0
    %14 = vsyncpa [#allocation8], 0
    // Predicated region
    $region2: #{_encoder_pallas.1} parent=1 // pred_check
      _
    $region3: #{_encoder_pallas.1} parent=1 // pred_check_branch
      %16 = sbr.rel (0) target = $region5
    $region4: #{_encoder_pallas.1} parent=1 // pred_region
      %s18 = ssub.s32 256, 256
      %19 = vsyncadd [#allocation3], %s18
      %s20 = sshll.u32 [#allocation2], 4
      %s21 = int_to_ptr.vmem [resolvable:$true] %s20
      %26 = dma.hbm_to_vmem [thread:$0]  %s0, 256, %s21, [#allocation3], 128, 128, 8
    $region5: #{_encoder_pallas.1} parent=1 // pred_fallthru
      _
    // Predicated region
    $region6: #{_encoder_pallas.1} parent=1 // pred_check
      _
    $region7: #{_encoder_pallas.1} parent=1 // pred_check_branch
      %28 = sbr.rel (0) target = $region9
    $region8: #{_encoder_pallas.1} parent=1 // pred_region
      %s30 = ssub.s32 2048, 2048
      %31 = vsyncadd [#allocation5], %s30
      %s32 = sshll.u32 [#allocation4], 4
      %s33 = int_to_ptr.vmem [resolvable:$true] %s32
      %38 = dma.hbm_to_vmem [thread:$0]  %s1, 2048, %s33, [#allocation5], 128, 128, 8
    $region9: #{_encoder_pallas.1} parent=1 // pred_fallthru
      _
    // Predicated region
    $region10: #{_encoder_pallas.1} parent=1 // pred_check
      _
    $region11: #{_encoder_pallas.1} parent=1 // pred_check_branch
      %40 = sbr.rel (0) target = $region13
    $region12: #{_encoder_pallas.1} parent=1 // pred_region
      _
    $region13: #{_encoder_pallas.1} parent=1 // pred_fallthru
      _
    // Predicated region
    $region14: #{_encoder_pallas.1} parent=1 // pred_check
      _
    $region15: #{_encoder_pallas.1} parent=1 // pred_check_branch
      %42 = sbr.rel (0) target = $region17
    $region16: #{_encoder_pallas.1} parent=1 // pred_region
      %s44 = ssub.s32 2048, 2048
      %45 = vsyncadd [#allocation5], %s44
      %s46 = sshll.u32 [#allocation6], 4
      %s47 = int_to_ptr.vmem [resolvable:$true] %s46
      %52 = dma.hbm_to_vmem [thread:$0]  %s3, 2048, %s47, [#allocation5], 128, 128, 8
    $region17: #{_encoder_pallas.1} parent=1 // pred_fallthru
      _
    // Predicated region
    $region18: #{_encoder_pallas.1} parent=1 // pred_check
      _
    $region19: #{_encoder_pallas.1} parent=1 // pred_check_branch
      %54 = sbr.rel (0) target = $region21
    $region20: #{_encoder_pallas.1} parent=1 // pred_region
      _
    $region21: #{_encoder_pallas.1} parent=1 // pred_fallthru
      _
    // Predicated region
    $region22: #{_encoder_pallas.1} parent=1 // pred_check
      _
    $region23: #{_encoder_pallas.1} parent=1 // pred_check_branch
      %56 = sbr.rel (0) target = $region25
    $region24: #{_encoder_pallas.1} parent=1 // pred_region
      %s58 = ssub.s32 4096, 4096
      %59 = vsyncadd [#allocation8], %s58
      %s60 = sshll.u32 [#allocation7], 4
      %s61 = int_to_ptr.vmem [resolvable:$true] %s60
      %66 = dma.hbm_to_vmem [thread:$0]  %s5, 4096, %s61, [#allocation8], 256, 256, 16
    $region25: #{_encoder_pallas.1} parent=1 // pred_fallthru
      _
    // Predicated region
    $region26: #{_encoder_pallas.1} parent=1 // pred_check
      _
    $region27: #{_encoder_pallas.1} parent=1 // pred_check_branch
      %68 = sbr.rel (0) target = $region29
    $region28: #{_encoder_pallas.1} parent=1 // pred_region
      _
    $region29: #{_encoder_pallas.1} parent=1 // pred_fallthru
      _
    // Predicated region
    $region30: #{_encoder_pallas.1} parent=1 // pred_check
      _
    $region31: #{_encoder_pallas.1} parent=1 // pred_check_branch
      %70 = sbr.rel (0) target = $region33
    $region32: #{_encoder_pallas.1} parent=1 // pred_region
      %71 = dma.done [#allocation3], 256
    $region33: #{_encoder_pallas.1} parent=1 // pred_fallthru
      _
    // Predicated region
    $region34: #{_encoder_pallas.1} parent=1 // pred_check
      _
    $region35: #{_encoder_pallas.1} parent=1 // pred_check_branch
      %73 = sbr.rel (0) target = $region37
    $region36: #{_encoder_pallas.1} parent=1 // pred_region
      %74 = dma.done [#allocation5], 2048
    $region37: #{_encoder_pallas.1} parent=1 // pred_fallthru
      _
    // Predicated region
    $region38: #{_encoder_pallas.1} parent=1 // pred_check
      _
    $region39: #{_encoder_pallas.1} parent=1 // pred_check_branch
      %76 = sbr.rel (0) target = $region41
    $region40: #{_encoder_pallas.1} parent=1 // pred_region
      %77 = dma.done [#allocation5], 2048
    $region41: #{_encoder_pallas.1} parent=1 // pred_fallthru
      _
    // Predicated region
    $region42: #{_encoder_pallas.1} parent=1 // pred_check
      _
    $region43: #{_encoder_pallas.1} parent=1 // pred_check_branch
      %79 = sbr.rel (0) target = $region45
    $region44: #{_encoder_pallas.1} parent=1 // pred_region
      %80 = dma.done [#allocation8], 4096
    $region45: #{_encoder_pallas.1} parent=1 // pred_fallthru
      _
    %v81 = vld [vmem:[#allocation2] sm:$0xff]
    %v82 = vld [vmem:[#allocation2 + $0x8] sm:$0xff]
    %v83 = vld [vmem:[#allocation4] sm:$0xff]
    %v84 = vld [vmem:[#allocation4 + $0x8] sm:$0xff]
    %v85 = vld [vmem:[#allocation4 + $0x10] sm:$0xff]
    %v86 = vld [vmem:[#allocation4 + $0x18] sm:$0xff]
    %v87 = vld [vmem:[#allocation4 + $0x20] sm:$0xff]
    %v88 = vld [vmem:[#allocation4 + $0x28] sm:$0xff]
    %v89 = vld [vmem:[#allocation4 + $0x30] sm:$0xff]
    %v90 = vld [vmem:[#allocation4 + $0x38] sm:$0xff]
    %v91 = vld [vmem:[#allocation4 + $0x40] sm:$0xff]
    %v92 = vld [vmem:[#allocation4 + $0x48] sm:$0xff]
    %v93 = vld [vmem:[#allocation4 + $0x50] sm:$0xff]
    %v94 = vld [vmem:[#allocation4 + $0x58] sm:$0xff]
    %v95 = vld [vmem:[#allocation4 + $0x60] sm:$0xff]
    %v96 = vld [vmem:[#allocation4 + $0x68] sm:$0xff]
    %v97 = vld [vmem:[#allocation4 + $0x70] sm:$0xff]
    %v98 = vld [vmem:[#allocation4 + $0x78] sm:$0xff]
    %v99 = vld [vmem:[%s2] sm:$0x1]
    %v101 = vlaneseq
    %v102 = vshrl.u32 %v101, 7
    %v103 = vsub.s32 0, %v102
    %v104 = vrot.slane %v99, %v103
    %106 = vmatprep.subr.mxu0 0.0
    %107 = vmatpush1.msra.mxu0 %v98
    %108 = vmatprep.subr.mxu0 0.0
    %109 = vmatpush1.msra.mxu0 %v97
    %110 = vmatprep.subr.mxu0 0.0
    %111 = vmatpush1.msra.mxu0 %v96
    %112 = vmatprep.subr.mxu0 0.0
    %113 = vmatpush1.msra.mxu0 %v95
    %114 = vmatprep.subr.mxu0 0.0
    %115 = vmatpush1.msra.mxu0 %v94
    %116 = vmatprep.subr.mxu0 0.0
    %117 = vmatpush1.msra.mxu0 %v93
    %118 = vmatprep.subr.mxu0 0.0
    %119 = vmatpush1.msra.mxu0 %v92
    %120 = vmatprep.subr.mxu0 0.0
    %121 = vmatpush1.msra.mxu0 %v91
    %122 = vmatprep.subr.mxu0 0.0
    %123 = vmatpush1.msra.mxu0 %v90
    %124 = vmatprep.subr.mxu0 0.0
    %125 = vmatpush1.msra.mxu0 %v89
    %126 = vmatprep.subr.mxu0 0.0
    %127 = vmatpush1.msra.mxu0 %v88
    %128 = vmatprep.subr.mxu0 0.0
    %129 = vmatpush1.msra.mxu0 %v87
    %130 = vmatprep.subr.mxu0 0.0
    %131 = vmatpush1.msra.mxu0 %v86
    %132 = vmatprep.subr.mxu0 0.0
    %133 = vmatpush1.msra.mxu0 %v85
    %134 = vmatprep.subr.mxu0 0.0
    %135 = vmatpush1.msra.mxu0 %v84
    %136 = vmatprep.subr.mxu0 0.0
    %137 = vmatpush1.msra.mxu0 %v83
    %138 = vmatprep.subr.mxu0 0.0
    %139 = vmatpush2.msra.mxu0 0.0
    %140 = vmatprep.subr.mxu0 0.0
    %141 = vmatpush2.msra.mxu0 0.0
    %142 = vmatprep.subr.mxu0 0.0
    %143 = vmatpush2.msra.mxu0 0.0
    %144 = vmatprep.subr.mxu0 0.0
    %145 = vmatpush2.msra.mxu0 0.0
    %146 = vmatprep.subr.mxu0 0.0
    %147 = vmatpush2.msra.mxu0 0.0
    %148 = vmatprep.subr.mxu0 0.0
    %149 = vmatpush2.msra.mxu0 0.0
    %150 = vmatprep.subr.mxu0 0.0
    %151 = vmatpush2.msra.mxu0 0.0
    %152 = vmatprep.subr.mxu0 0.0
    %153 = vmatpush2.msra.mxu0 0.0
    %154 = vmatprep.subr.mxu0 0.0
    %155 = vmatpush2.msra.mxu0 0.0
    %156 = vmatprep.subr.mxu0 0.0
    %157 = vmatpush2.msra.mxu0 0.0
    %158 = vmatprep.subr.mxu0 0.0
    %159 = vmatpush2.msra.mxu0 0.0
    %160 = vmatprep.subr.mxu0 0.0
    %161 = vmatpush2.msra.mxu0 0.0
    %162 = vmatprep.subr.mxu0 0.0
    %163 = vmatpush2.msra.mxu0 0.0
    %164 = vmatprep.subr.mxu0 0.0
    %165 = vmatpush2.msra.mxu0 0.0
    %166 = vmatprep.subr.mxu0 0.0
    %167 = vmatpush2.msra.mxu0 0.0
    %168 = vmatprep.subr.mxu0 0.0
    %169 = vmatpush2.msra.mxu0 0.0
    %170 = vmatprep.mubr.f32.mxu0 0.0
    %171 = vmatmul.mubr.f32.gmra.mxu0 %v81
    %v172 = vpop.f32.mrf.mxu0
    %v173 = vadd.f32 %v104, %v172
    %v174 = vpop.f32.mrf.mxu0
    %175 = vmatprep.mubr.f32.mxu0 0.0
    %176 = vmatmul.mubr.f32.gmra.mxu0 %v82
    %v177 = vpop.f32.mrf.mxu0
    %v178 = vadd.f32 %v104, %v177
    %v179 = vpop.f32.mrf.mxu0
    %180 = vdwg.mxu0
    %v181 = vmax.f32 %v173, 0.0
    %v182 = vmax.f32 %v178, 0.0
    %v183 = vld [vmem:[#allocation6] sm:$0xff]
    %v184 = vld [vmem:[#allocation6 + $0x8] sm:$0xff]
    %v185 = vld [vmem:[#allocation6 + $0x10] sm:$0xff]
    %v186 = vld [vmem:[#allocation6 + $0x18] sm:$0xff]
    %v187 = vld [vmem:[#allocation6 + $0x20] sm:$0xff]
    %v188 = vld [vmem:[#allocation6 + $0x28] sm:$0xff]
    %v189 = vld [vmem:[#allocation6 + $0x30] sm:$0xff]
    %v190 = vld [vmem:[#allocation6 + $0x38] sm:$0xff]
    %v191 = vld [vmem:[#allocation6 + $0x40] sm:$0xff]
    %v192 = vld [vmem:[#allocation6 + $0x48] sm:$0xff]
    %v193 = vld [vmem:[#allocation6 + $0x50] sm:$0xff]
    %v194 = vld [vmem:[#allocation6 + $0x58] sm:$0xff]
    %v195 = vld [vmem:[#allocation6 + $0x60] sm:$0xff]
    %v196 = vld [vmem:[#allocation6 + $0x68] sm:$0xff]
    %v197 = vld [vmem:[#allocation6 + $0x70] sm:$0xff]
    %v198 = vld [vmem:[#allocation6 + $0x78] sm:$0xff]
    %v199 = vld [vmem:[%s4] sm:$0x1]
    %v201 = vlaneseq
    %v202 = vshrl.u32 %v201, 7
    %v203 = vsub.s32 0, %v202
    %v204 = vrot.slane %v199, %v203
    %206 = vmatprep.subr.mxu0 0.0
    %207 = vmatpush1.msra.mxu0 %v198
    %208 = vmatprep.subr.mxu0 0.0
    %209 = vmatpush1.msra.mxu0 %v197
    %210 = vmatprep.subr.mxu0 0.0
    %211 = vmatpush1.msra.mxu0 %v196
    %212 = vmatprep.subr.mxu0 0.0
    %213 = vmatpush1.msra.mxu0 %v195
    %214 = vmatprep.subr.mxu0 0.0
    %215 = vmatpush1.msra.mxu0 %v194
    %216 = vmatprep.subr.mxu0 0.0
    %217 = vmatpush1.msra.mxu0 %v193
    %218 = vmatprep.subr.mxu0 0.0
    %219 = vmatpush1.msra.mxu0 %v192
    %220 = vmatprep.subr.mxu0 0.0
    %221 = vmatpush1.msra.mxu0 %v191
    %222 = vmatprep.subr.mxu0 0.0
    %223 = vmatpush1.msra.mxu0 %v190
    %224 = vmatprep.subr.mxu0 0.0
    %225 = vmatpush1.msra.mxu0 %v189
    %226 = vmatprep.subr.mxu0 0.0
    %227 = vmatpush1.msra.mxu0 %v188
    %228 = vmatprep.subr.mxu0 0.0
    %229 = vmatpush1.msra.mxu0 %v187
    %230 = vmatprep.subr.mxu0 0.0
    %231 = vmatpush1.msra.mxu0 %v186
    %232 = vmatprep.subr.mxu0 0.0
    %233 = vmatpush1.msra.mxu0 %v185
    %234 = vmatprep.subr.mxu0 0.0
    %235 = vmatpush1.msra.mxu0 %v184
    %236 = vmatprep.subr.mxu0 0.0
    %237 = vmatpush1.msra.mxu0 %v183
    %238 = vmatprep.subr.mxu0 0.0
    %239 = vmatpush2.msra.mxu0 0.0
    %240 = vmatprep.subr.mxu0 0.0
    %241 = vmatpush2.msra.mxu0 0.0
    %242 = vmatprep.subr.mxu0 0.0
    %243 = vmatpush2.msra.mxu0 0.0
    %244 = vmatprep.subr.mxu0 0.0
    %245 = vmatpush2.msra.mxu0 0.0
    %246 = vmatprep.subr.mxu0 0.0
    %247 = vmatpush2.msra.mxu0 0.0
    %248 = vmatprep.subr.mxu0 0.0
    %249 = vmatpush2.msra.mxu0 0.0
    %250 = vmatprep.subr.mxu0 0.0
    %251 = vmatpush2.msra.mxu0 0.0
    %252 = vmatprep.subr.mxu0 0.0
    %253 = vmatpush2.msra.mxu0 0.0
    %254 = vmatprep.subr.mxu0 0.0
    %255 = vmatpush2.msra.mxu0 0.0
    %256 = vmatprep.subr.mxu0 0.0
    %257 = vmatpush2.msra.mxu0 0.0
    %258 = vmatprep.subr.mxu0 0.0
    %259 = vmatpush2.msra.mxu0 0.0
    %260 = vmatprep.subr.mxu0 0.0
    %261 = vmatpush2.msra.mxu0 0.0
    %262 = vmatprep.subr.mxu0 0.0
    %263 = vmatpush2.msra.mxu0 0.0
    %264 = vmatprep.subr.mxu0 0.0
    %265 = vmatpush2.msra.mxu0 0.0
    %266 = vmatprep.subr.mxu0 0.0
    %267 = vmatpush2.msra.mxu0 0.0
    %268 = vmatprep.subr.mxu0 0.0
    %269 = vmatpush2.msra.mxu0 0.0
    %270 = vmatprep.mubr.f32.mxu0 0.0
    %271 = vmatmul.mubr.f32.gmra.mxu0 %v181
    %v272 = vpop.f32.mrf.mxu0
    %v273 = vadd.f32 %v204, %v272
    %v274 = vpop.f32.mrf.mxu0
    %275 = vmatprep.mubr.f32.mxu0 0.0
    %276 = vmatmul.mubr.f32.gmra.mxu0 %v182
    %v277 = vpop.f32.mrf.mxu0
    %v278 = vadd.f32 %v204, %v277
    %v279 = vpop.f32.mrf.mxu0
    %280 = vdwg.mxu0
    %v281 = vmax.f32 %v273, 0.0
    %v282 = vmax.f32 %v278, 0.0
    %v283 = vld [vmem:[#allocation7] sm:$0xff]
    %v284 = vld [vmem:[#allocation7 + $0x8] sm:$0xff]
    %v285 = vld [vmem:[#allocation7 + $0x10] sm:$0xff]
    %v286 = vld [vmem:[#allocation7 + $0x18] sm:$0xff]
    %v287 = vld [vmem:[#allocation7 + $0x20] sm:$0xff]
    %v288 = vld [vmem:[#allocation7 + $0x28] sm:$0xff]
    %v289 = vld [vmem:[#allocation7 + $0x30] sm:$0xff]
    %v290 = vld [vmem:[#allocation7 + $0x38] sm:$0xff]
    %v291 = vld [vmem:[#allocation7 + $0x40] sm:$0xff]
    %v292 = vld [vmem:[#allocation7 + $0x48] sm:$0xff]
    %v293 = vld [vmem:[#allocation7 + $0x50] sm:$0xff]
    %v294 = vld [vmem:[#allocation7 + $0x58] sm:$0xff]
    %v295 = vld [vmem:[#allocation7 + $0x60] sm:$0xff]
    %v296 = vld [vmem:[#allocation7 + $0x68] sm:$0xff]
    %v297 = vld [vmem:[#allocation7 + $0x70] sm:$0xff]
    %v298 = vld [vmem:[#allocation7 + $0x78] sm:$0xff]
    %v299 = vld [vmem:[#allocation7 + $0x80] sm:$0xff]
    %v300 = vld [vmem:[#allocation7 + $0x88] sm:$0xff]
    %v301 = vld [vmem:[#allocation7 + $0x90] sm:$0xff]
    %v302 = vld [vmem:[#allocation7 + $0x98] sm:$0xff]
    %v303 = vld [vmem:[#allocation7 + $0xa0] sm:$0xff]
    %v304 = vld [vmem:[#allocation7 + $0xa8] sm:$0xff]
    %v305 = vld [vmem:[#allocation7 + $0xb0] sm:$0xff]
    %v306 = vld [vmem:[#allocation7 + $0xb8] sm:$0xff]
    %v307 = vld [vmem:[#allocation7 + $0xc0] sm:$0xff]
    %v308 = vld [vmem:[#allocation7 + $0xc8] sm:$0xff]
    %v309 = vld [vmem:[#allocation7 + $0xd0] sm:$0xff]
    %v310 = vld [vmem:[#allocation7 + $0xd8] sm:$0xff]
    %v311 = vld [vmem:[#allocation7 + $0xe0] sm:$0xff]
    %v312 = vld [vmem:[#allocation7 + $0xe8] sm:$0xff]
    %v313 = vld [vmem:[#allocation7 + $0xf0] sm:$0xff]
    %v314 = vld [vmem:[#allocation7 + $0xf8] sm:$0xff]
    %v315 = vld [vmem:[%s6] sm:$0x3]
    %v317 = vlaneseq
    %v318 = vshrl.u32 %v317, 7
    %v319 = vsub.s32 0, %v318
    %v320 = vrot.slane %v315, %v319
    %v321 = vlaneseq
    %v322 = vshrl.u32 %v321, 7
    %v323 = vsub.s32 1, %v322
    %v324 = vrot.slane %v315, %v323
    %327 = vmatprep.subr.mxu0 %v314
    %328 = vmatpush1.msra.mxu0 %v313
    %329 = vmatprep.subr.mxu0 %v312
    %330 = vmatpush1.msra.mxu0 %v311
    %331 = vmatprep.subr.mxu0 %v310
    %332 = vmatpush1.msra.mxu0 %v309
    %333 = vmatprep.subr.mxu0 %v308
    %334 = vmatpush1.msra.mxu0 %v307
    %335 = vmatprep.subr.mxu0 %v306
    %336 = vmatpush1.msra.mxu0 %v305
    %337 = vmatprep.subr.mxu0 %v304
    %338 = vmatpush1.msra.mxu0 %v303
    %339 = vmatprep.subr.mxu0 %v302
    %340 = vmatpush1.msra.mxu0 %v301
    %341 = vmatprep.subr.mxu0 %v300
    %342 = vmatpush1.msra.mxu0 %v299
    %343 = vmatprep.subr.mxu0 %v298
    %344 = vmatpush1.msra.mxu0 %v297
    %345 = vmatprep.subr.mxu0 %v296
    %346 = vmatpush1.msra.mxu0 %v295
    %347 = vmatprep.subr.mxu0 %v294
    %348 = vmatpush1.msra.mxu0 %v293
    %349 = vmatprep.subr.mxu0 %v292
    %350 = vmatpush1.msra.mxu0 %v291
    %351 = vmatprep.subr.mxu0 %v290
    %352 = vmatpush1.msra.mxu0 %v289
    %353 = vmatprep.subr.mxu0 %v288
    %354 = vmatpush1.msra.mxu0 %v287
    %355 = vmatprep.subr.mxu0 %v286
    %356 = vmatpush1.msra.mxu0 %v285
    %357 = vmatprep.subr.mxu0 %v284
    %358 = vmatpush1.msra.mxu0 %v283
    %359 = vmatprep.subr.mxu0 0.0
    %360 = vmatpush2.msra.mxu0 0.0
    %361 = vmatprep.subr.mxu0 0.0
    %362 = vmatpush2.msra.mxu0 0.0
    %363 = vmatprep.subr.mxu0 0.0
    %364 = vmatpush2.msra.mxu0 0.0
    %365 = vmatprep.subr.mxu0 0.0
    %366 = vmatpush2.msra.mxu0 0.0
    %367 = vmatprep.subr.mxu0 0.0
    %368 = vmatpush2.msra.mxu0 0.0
    %369 = vmatprep.subr.mxu0 0.0
    %370 = vmatpush2.msra.mxu0 0.0
    %371 = vmatprep.subr.mxu0 0.0
    %372 = vmatpush2.msra.mxu0 0.0
    %373 = vmatprep.subr.mxu0 0.0
    %374 = vmatpush2.msra.mxu0 0.0
    %375 = vmatprep.subr.mxu0 0.0
    %376 = vmatpush2.msra.mxu0 0.0
    %377 = vmatprep.subr.mxu0 0.0
    %378 = vmatpush2.msra.mxu0 0.0
    %379 = vmatprep.subr.mxu0 0.0
    %380 = vmatpush2.msra.mxu0 0.0
    %381 = vmatprep.subr.mxu0 0.0
    %382 = vmatpush2.msra.mxu0 0.0
    %383 = vmatprep.subr.mxu0 0.0
    %384 = vmatpush2.msra.mxu0 0.0
    %385 = vmatprep.subr.mxu0 0.0
    %386 = vmatpush2.msra.mxu0 0.0
    %387 = vmatprep.subr.mxu0 0.0
    %388 = vmatpush2.msra.mxu0 0.0
    %389 = vmatprep.subr.mxu0 0.0
    %390 = vmatpush2.msra.mxu0 0.0
    %391 = vmatprep.mubr.f32.mxu0 0.0
    %392 = vmatmul.mubr.f32.gmra.mxu0 %v281
    %v393 = vpop.f32.mrf.mxu0
    %v394 = vadd.f32 %v320, %v393
    %v395 = vpop.f32.mrf.mxu0
    %v396 = vadd.f32 %v324, %v395
    %397 = vmatprep.mubr.f32.mxu0 0.0
    %398 = vmatmul.mubr.f32.gmra.mxu0 %v282
    %v399 = vpop.f32.mrf.mxu0
    %v400 = vadd.f32 %v320, %v399
    %v401 = vpop.f32.mrf.mxu0
    %v402 = vadd.f32 %v324, %v401
    %403 = vdwg.mxu0
    %v404 = vmax.f32 %v396, 0.0
    %v405 = vmax.f32 %v402, 0.0
    %v406 = vand.u32 2147483647, %v396
    %v407 = vand.u32 2147483647, %v402
    %v408 = vsub.f32 0.0, %v406
    %v409 = vsub.f32 0.0, %v407
    %v410 = vmul.f32 %v408, 1.442695
    %v411 = vpow.pop %v410
    %v412 = vmul.f32 %v409, 1.442695
    %v413 = vpow.pop %v412
    %v414 = vadd.f32 %v411, 1.0
    %v415 = vlog2.pop %v414
    %v416 = vmul.f32 %v415, 0.6931472
    %v417 = vmul.f32 -0.5, %v411
    %v418 = vadd.f32 %v417, 1.0
    %v419 = vmul.f32 %v418, %v411
    %v420 = vand.u32 2147483647, %v411
    %vm421 = vcmp.lt.f32.partialorder %v420, 0.0004427343
    %v422 = vsel %vm421, %v419, %v416
    %v423 = vadd.f32 %v413, 1.0
    %v424 = vlog2.pop %v423
    %v425 = vmul.f32 %v424, 0.6931472
    %v426 = vmul.f32 -0.5, %v413
    %v427 = vadd.f32 %v426, 1.0
    %v428 = vmul.f32 %v427, %v413
    %v429 = vand.u32 2147483647, %v413
    %vm430 = vcmp.lt.f32.partialorder %v429, 0.0004427343
    %v431 = vsel %vm430, %v428, %v425
    %v432 = vadd.f32 %v404, %v422
    %v433 = vadd.f32 %v405, %v431
    %434 = vst [vmem:[%s7] sm:$0xff] %v394
    %435 = vst [vmem:[%s7 + $0x10] sm:$0xff] %v400
    %436 = vst [vmem:[%s7 + $0x8] sm:$0xff] %v432
    %437 = vst [vmem:[%s7 + $0x18] sm:$0xff] %v433
    // Predicated region
    $region46: #{_encoder_pallas.1} parent=1 // pred_check
      _
    $region47: #{_encoder_pallas.1} parent=1 // pred_check_branch
      %439 = sbr.rel (0) target = $region49
    $region48: #{_encoder_pallas.1} parent=1 // pred_region
      _
    $region49: #{_encoder_pallas.1} parent=1 // pred_fallthru
      _
    // Predicated region
    $region50: #{_encoder_pallas.1} parent=1 // pred_check
      _
    $region51: #{_encoder_pallas.1} parent=1 // pred_check_branch
      %441 = sbr.rel (0) target = $region53
    $region52: #{_encoder_pallas.1} parent=1 // pred_region
      _
    $region53: #{_encoder_pallas.1} parent=1 // pred_fallthru
      _
    %442 = vsyncpa [#allocation3], 1
    %443 = vsyncpa [#allocation5], 1
    %444 = vsyncpa [#allocation8], 1

</llo_original>
